<compile_context>
chip_gen: v5e
topology: v5e:2x2
jax: 0.10.0
libtpu: 0.0.40
codegen_flags: <defaults>
</compile_context>

<pallas_src>
import functools

import jax
import jax.numpy as jnp
from jax.experimental import pallas as pl
from jax.experimental.pallas import tpu as pltpu


def uet2_kernel(logits_ref, targets_ref, aff_ref, out_ref, *, alpha, n_rows):
    p = pl.program_id(0)            # partial (parallel) axis — one per TC on v7x
    i = pl.program_id(1)            # streaming reduction axis
    n_inner = pl.num_programs(1)

    @pl.when(i == 0)
    def _():
        out_ref[...] = jnp.zeros_like(out_ref)

    # Single f32 upcast per tile (inputs may arrive as bf16).
    logits = logits_ref[...].astype(jnp.float32)        # (TN, C)
    aff = aff_ref[...].astype(jnp.float32)              # (TN, C)
    tgt = targets_ref[...]                              # (TN, 1) int32
    tn, c = logits.shape

    # Row-validity mask from the *unclamped* logical tile index.  Padded-row garbage is
    # row-local (every reduction below is per-row), so only row_loss needs masking.
    tile_idx = p * n_inner + i
    row_ids = jax.lax.broadcasted_iota(jnp.int32, (tn, 1), 0) + tile_idx * tn
    valid = row_ids < n_rows                            # (TN, 1) bool

    # Numerically-stable log-softmax pieces (2 cross-lane reductions).
    row_max = jnp.max(logits, axis=1, keepdims=True)                     # (TN, 1)
    shifted = logits - row_max                                           # (TN, C)
    lse = jnp.log(jnp.sum(jnp.exp(shifted), axis=1, keepdims=True))      # (TN, 1)

    # Single fused class-axis reduction:
    #   refined  = (1-alpha)*onehot + alpha*aff
    #   row_loss = -sum_c refined * (shifted - lse)   ( == -sum_c refined * log_softmax )
    col_ids = jax.lax.broadcasted_iota(jnp.int32, (tn, c), 1)
    refined = alpha * aff + jnp.where(col_ids == tgt, 1.0 - alpha, 0.0)  # (TN, C)
    row_loss = -jnp.sum(refined * (shifted - lse), axis=1, keepdims=True)  # (TN, 1)
    row_loss = jnp.where(valid, row_loss, 0.0)

    out_ref[...] += jnp.sum(row_loss, axis=0, keepdims=True)[None]       # (1, 1, 1)


def _pick_tile_rows(n_rows, n_cols, itemsize, *, target_buffer_bytes=1 << 20):
    """Largest sublane-aligned row tile giving ~target bytes per (TN, C) input buffer.

    ~1 MiB/buffer keeps 2 inputs x 2 pipeline buffers + in-kernel f32 temporaries well
    under v5e's 16 MiB default scoped-VMEM limit and v7x's 64 MiB physical VMEM, while
    being large enough that the ~0.35 us per-grid-step overhead is amortized.
    """
    itemsize = max(1, int(itemsize))
    sublane = max(8, 32 // itemsize)          # 8 rows f32, 16 bf16, 32 int8/fp8
    tn = target_buffer_bytes // max(1, n_cols * itemsize)
    tn = (tn // sublane) * sublane
    tn = max(sublane, tn)
    # TODO(synk): class-axis tiling (two-pass / online LSE) for very large C, where even
    #             a `sublane`-row tile would exceed the intended VMEM budget.
    if tn >= n_rows:
        return n_rows   # single full-extent block (always a legal block shape)
    return int(tn)


def uet2_loss(logits, targets, aff_score, alpha=0.3, tile_rows=None, num_partials=2):
    """Pallas implementation of UET2.forward (alphas=None path)."""
    n, c = logits.shape
    itemsize = jnp.dtype(logits.dtype).itemsize
    if tile_rows is None:
        tile_rows = _pick_tile_rows(n, c, itemsize)
    tn = int(tile_rows)

    n_tiles = pl.cdiv(n, tn)
    num_par = max(1, min(int(num_partials), n_tiles))
    n_inner = pl.cdiv(n_tiles, num_par)

    def row_map(p, i):
        # Clamp so padded partial tiles never issue an out-of-range DMA; the kernel's
        # row-validity mask (built from the unclamped index) zeroes their contribution.
        return (jnp.minimum(p * n_inner + i, n_tiles - 1), 0)

    targets_2d = targets.astype(jnp.int32).reshape(n, 1)
    kernel = functools.partial(uet2_kernel, alpha=float(alpha), n_rows=n)

    partials = pl.pallas_call(
        kernel,
        out_shape=jax.ShapeDtypeStruct((num_par, 1, 1), jnp.float32),
        grid_spec=pltpu.PrefetchScalarGridSpec(
            num_scalar_prefetch=0,
            grid=(num_par, n_inner),
            in_specs=[
                pl.BlockSpec((tn, c), row_map),    # logits row tile
                pl.BlockSpec((tn, 1), row_map),    # targets (TN, 1) int32
                pl.BlockSpec((tn, c), row_map),    # aff_score row tile
            ],
            out_specs=pl.BlockSpec((1, 1, 1), lambda p, i: (p, 0, 0)),
        ),
        compiler_params=pltpu.CompilerParams(
            dimension_semantics=("parallel", "arbitrary"),
        ),
    )(logits, targets_2d, aff_score)

    return jnp.sum(partials) / jnp.float32(n)


def uet2_loss_ref(logits, targets, aff_score, alpha=0.3):
    """Pure-JAX reference for verification."""
    n, c = logits.shape
    logits = logits.astype(jnp.float32)
    aff_score = aff_score.astype(jnp.float32)
    onehot = jax.nn.one_hot(targets, c, dtype=jnp.float32)
    refined = (1.0 - alpha) * onehot + alpha * aff_score
    log_preds = jax.nn.log_softmax(logits, axis=1)
    return jnp.mean(jnp.sum(-refined * log_preds, axis=1))


if __name__ == "__main__":
    key = jax.random.PRNGKey(0)
    k1, k2, k3 = jax.random.split(key, 3)

    # Small shapes; N deliberately not a multiple of 8 to exercise the masked tail.
    N, C = 20, 32
    logits = jax.random.normal(k1, (N, C), dtype=jnp.float32)
    targets = jax.random.randint(k2, (N,), 0, C, dtype=jnp.int32)
    # affinity scores: a valid per-row distribution (like soft pseudo-labels)
    aff_score = jax.nn.softmax(jax.random.normal(k3, (N, C), dtype=jnp.float32), axis=1)

    ref = uet2_loss_ref(logits, targets, aff_score, alpha=0.3)

    # Default tile choice (small inputs -> single full-batch block, one partial).
    loss_full = jax.block_until_ready(uet2_loss(logits, targets, aff_score, alpha=0.3))
    assert jnp.allclose(loss_full, ref, rtol=1e-5, atol=1e-5), (loss_full, ref)

    # Forced small tile: 3 row tiles split over 2 partials -> exercises the streaming
    # accumulator, the clamped padded partial tile, and the cross-partial sum.
    loss_tiled = jax.block_until_ready(
        uet2_loss(logits, targets, aff_score, alpha=0.3, tile_rows=8))
    assert jnp.allclose(loss_tiled, ref, rtol=1e-5, atol=1e-5), (loss_tiled, ref)

    # bf16 inputs (dtype-aware tiling, 16-row sublane multiple, in-register f32 upcast).
    logits_bf = logits.astype(jnp.bfloat16)
    aff_bf = aff_score.astype(jnp.bfloat16)
    ref_bf = uet2_loss_ref(logits_bf, targets, aff_bf, alpha=0.3)
    loss_bf = jax.block_until_ready(
        uet2_loss(logits_bf, targets, aff_bf, alpha=0.3, tile_rows=16))
    assert jnp.allclose(loss_bf, ref_bf, rtol=1e-4, atol=1e-4), (loss_bf, ref_bf)

    print("KERNEL_OK")
</pallas_src>

<mosaic_0001>
module attributes {stable_mosaic.version = 11 : i64} {
  func.func @uet2_kernel(%arg0: i32, %arg1: i32, %arg2: memref<20x32xf32, #tpu.memory_space<vmem>>, %arg3: memref<20x1xi32, #tpu.memory_space<vmem>>, %arg4: memref<20x32xf32, #tpu.memory_space<vmem>>, %arg5: memref<1x1x1xf32, #tpu.memory_space<vmem>>) attributes {dimension_semantics = [#tpu.dimension_semantics<parallel>, #tpu.dimension_semantics<arbitrary>], iteration_bounds = array<i64: 1, 1>, scalar_prefetch = 0 : i64, scratch_operands = 0 : i64, tpu.core_type = #tpu.core_type<tc>, window_params = [{transform_indices = @transform_0, window_bounds = array<i64: 20, 32>}, {transform_indices = @transform_1, window_bounds = array<i64: 20, 1>}, {transform_indices = @transform_2, window_bounds = array<i64: 20, 32>}, {transform_indices = @transform_3, window_bounds = array<i64: 1, 1, 1>}]} {
    %c0_i32 = arith.constant 0 : i32
    %0 = arith.cmpi eq, %arg1, %c0_i32 : i32
    %1 = arith.extui %0 : i1 to i32
    %c0_i32_0 = arith.constant 0 : i32
    %2 = arith.cmpi ne, %1, %c0_i32_0 : i32
    scf.if %2 {
      %cst_21 = arith.constant 0.000000e+00 : f32
      %46 = vector.broadcast %cst_21 : f32 to vector<1x1x1xf32>
      %c0_22 = arith.constant 0 : index
      %c0_23 = arith.constant 0 : index
      %c0_24 = arith.constant 0 : index
      %47 = vector.load %arg5[%c0_22, %c0_23, %c0_24] : memref<1x1x1xf32, #tpu.memory_space<vmem>>, vector<1x1x1xf32>
      tpu.vector_store %arg5[%c0_22, %c0_23, %c0_24], %46 {strides = array<i32>} : memref<1x1x1xf32, #tpu.memory_space<vmem>>, vector<1x1x1xf32>,
    } else {
    }
    %c0 = arith.constant 0 : index
    %c0_1 = arith.constant 0 : index
    %3 = vector.load %arg2[%c0, %c0_1] : memref<20x32xf32, #tpu.memory_space<vmem>>, vector<20x32xf32>
    %c0_2 = arith.constant 0 : index
    %c0_3 = arith.constant 0 : index
    %4 = vector.load %arg4[%c0_2, %c0_3] : memref<20x32xf32, #tpu.memory_space<vmem>>, vector<20x32xf32>
    %c0_4 = arith.constant 0 : index
    %c0_5 = arith.constant 0 : index
    %5 = vector.load %arg3[%c0_4, %c0_5] : memref<20x1xi32, #tpu.memory_space<vmem>>, vector<20x1xi32>
    %c1_i32 = arith.constant 1 : i32
    %6 = arith.muli %arg0, %c1_i32 : i32
    %7 = arith.addi %6, %arg1 : i32
    %8 = tpu.iota {dimensions = array<i32: 0>} : vector<20x1xi32>
    %c20_i32 = arith.constant 20 : i32
    %9 = arith.muli %7, %c20_i32 : i32
    %10 = vector.broadcast %9 : i32 to vector<20x1xi32>
    %11 = arith.addi %8, %10 : vector<20x1xi32>
    %c20_i32_6 = arith.constant 20 : i32
    %12 = vector.broadcast %c20_i32_6 : i32 to vector<20x1xi32>
    %13 = arith.cmpi slt, %11, %12 : vector<20x1xi32>
    %cst = arith.constant dense<0xFF800000> : vector<20xf32>
    %14 = vector.multi_reduction <maximumf>, %3, %cst [1] : vector<20x32xf32> to vector<20xf32>
    %15 = vector.shape_cast %14 : vector<20xf32> to vector<20x1xf32>
    %16 = vector.broadcast %15 : vector<20x1xf32> to vector<20x32xf32>
    %17 = arith.subf %3, %16 : vector<20x32xf32>
    %18 = math.exp %17 : vector<20x32xf32>
    %cst_7 = arith.constant dense<0.000000e+00> : vector<20xf32>
    %19 = vector.multi_reduction <add>, %18, %cst_7 [1] : vector<20x32xf32> to vector<20xf32>
    %20 = vector.shape_cast %19 : vector<20xf32> to vector<20x1xf32>
    %21 = math.log %20 : vector<20x1xf32>
    %22 = tpu.iota {dimensions = array<i32: 1>} : vector<20x32xi32>
    %cst_8 = arith.constant 3.000000e-01 : f32
    %23 = vector.broadcast %cst_8 : f32 to vector<20x32xf32>
    %24 = arith.mulf %23, %4 : vector<20x32xf32>
    %25 = vector.broadcast %5 : vector<20x1xi32> to vector<20x32xi32>
    %26 = arith.cmpi eq, %22, %25 : vector<20x32xi32>
    %cst_9 = arith.constant 0.699999988 : f32
    %cst_10 = arith.constant 0.000000e+00 : f32
    %27 = vector.broadcast %cst_9 : f32 to vector<20x32xf32>
    %28 = vector.broadcast %cst_10 : f32 to vector<20x32xf32>
    %29 = arith.select %26, %27, %28 : vector<20x32xi1>, vector<20x32xf32>
    %30 = arith.addf %24, %29 : vector<20x32xf32>
    %31 = vector.broadcast %21 : vector<20x1xf32> to vector<20x32xf32>
    %32 = arith.subf %17, %31 : vector<20x32xf32>
    %33 = arith.mulf %30, %32 : vector<20x32xf32>
    %cst_11 = arith.constant dense<0.000000e+00> : vector<20xf32>
    %34 = vector.multi_reduction <add>, %33, %cst_11 [1] : vector<20x32xf32> to vector<20xf32>
    %35 = vector.shape_cast %34 : vector<20xf32> to vector<20x1xf32>
    %cst_12 = arith.constant 0.000000e+00 : f32
    %36 = vector.broadcast %cst_12 : f32 to vector<20x1xf32>
    %37 = arith.subf %36, %35 : vector<20x1xf32>
    %cst_13 = arith.constant 0.000000e+00 : f32
    %38 = vector.broadcast %cst_13 : f32 to vector<20x1xf32>
    %39 = arith.select %13, %37, %38 : vector<20x1xi1>, vector<20x1xf32>
    %c0_14 = arith.constant 0 : index
    %c0_15 = arith.constant 0 : index
    %c0_16 = arith.constant 0 : index
    %40 = vector.load %arg5[%c0_14, %c0_15, %c0_16] : memref<1x1x1xf32, #tpu.memory_space<vmem>>, vector<1x1x1xf32>
    %cst_17 = arith.constant dense<0.000000e+00> : vector<1xf32>
    %41 = vector.multi_reduction <add>, %39, %cst_17 [0] : vector<20x1xf32> to vector<1xf32>
    %42 = vector.shape_cast %41 : vector<1xf32> to vector<1x1xf32>
    %43 = vector.shape_cast %42 : vector<1x1xf32> to vector<1x1x1xf32>
    %44 = arith.addf %40, %43 : vector<1x1x1xf32>
    %c0_18 = arith.constant 0 : index
    %c0_19 = arith.constant 0 : index
    %c0_20 = arith.constant 0 : index
    %45 = vector.load %arg5[%c0_18, %c0_19, %c0_20] : memref<1x1x1xf32, #tpu.memory_space<vmem>>, vector<1x1x1xf32>
    tpu.vector_store %arg5[%c0_18, %c0_19, %c0_20], %44 {strides = array<i32>} : memref<1x1x1xf32, #tpu.memory_space<vmem>>, vector<1x1x1xf32>,
    return
  }
  func.func @transform_0(%arg0: i32, %arg1: i32) -> (i32, i32) {
    %c1_i32 = arith.constant 1 : i32
    %0 = arith.muli %arg0, %c1_i32 : i32
    %1 = arith.addi %0, %arg1 : i32
    %c0_i32 = arith.constant 0 : i32
    %2 = arith.minsi %1, %c0_i32 : i32
    %c0_i32_0 = arith.constant 0 : i32
    %c0_i32_1 = arith.constant 0 : i32
    return %2, %c0_i32_0 : i32, i32
  }
  func.func @transform_1(%arg0: i32, %arg1: i32) -> (i32, i32) {
    %c1_i32 = arith.constant 1 : i32
    %0 = arith.muli %arg0, %c1_i32 : i32
    %1 = arith.addi %0, %arg1 : i32
    %c0_i32 = arith.constant 0 : i32
    %2 = arith.minsi %1, %c0_i32 : i32
    %c0_i32_0 = arith.constant 0 : i32
    %c0_i32_1 = arith.constant 0 : i32
    return %2, %c0_i32_0 : i32, i32
  }
  func.func @transform_2(%arg0: i32, %arg1: i32) -> (i32, i32) {
    %c1_i32 = arith.constant 1 : i32
    %0 = arith.muli %arg0, %c1_i32 : i32
    %1 = arith.addi %0, %arg1 : i32
    %c0_i32 = arith.constant 0 : i32
    %2 = arith.minsi %1, %c0_i32 : i32
    %c0_i32_0 = arith.constant 0 : i32
    %c0_i32_1 = arith.constant 0 : i32
    return %2, %c0_i32_0 : i32, i32
  }
  func.func @transform_3(%arg0: i32, %arg1: i32) -> (i32, i32, i32) {
    %c0_i32 = arith.constant 0 : i32
    %c0_i32_0 = arith.constant 0 : i32
    %c0_i32_1 = arith.constant 0 : i32
    return %arg0, %c0_i32, %c0_i32_0 : i32, i32, i32
  }
}

</mosaic_0001>

<llo_original>
// kernel: tpu_custom_call.1
$region0: #{tpu_custom_call.1}
  #allocation0 [shape = 'u32[]', space=smem, size = 0x4, offset = 0x4, fixed_abs, tag = 'smem constant byte address 0x4 - core index']
  #allocation1 [shape = 'u32[72,128]{1,0:T(1,128)}', space=vmem, size = 0x9000, scoped, tag = 'internal scratch']
  %s0 = inlined_call_operand.vmem [shape: f32[20,32], index: 0, kind: input, shape index: {}]
  %s1 = inlined_call_operand.vmem [shape: s32[20,1], index: 1, kind: input, shape index: {}]
  %s2 = inlined_call_operand.hbm [shape: f32[20,32], index: 2, kind: input, shape index: {}]
  %s3 = inlined_call_operand.hbm [shape: f32[1,1,1], index: 3, kind: output, shape index: {}]
  %s4 = sld [smem:[#allocation0]]
  $region30: #{tpu_custom_call.1} parent=0
    _
  %s6 = ssub.s32 1, %s4
  %s7 = scalar_select 0, %s6, %s4
  $region1: #{tpu_custom_call.1} parent=0
    #allocation2 [shape = 'u8[12288]{0}', space=vmem, size = 0x3000, scoped, tag = 'input window, operand 2, single buffered']
    #allocation3 [shape = 's32[1]{0}', space=sflag, size = 0x4, scoped, tag = 'scoped memory for tpu_custom_call.1']
    #allocation4 [shape = 's32[1]{0}', space=sflag, size = 0x4, scoped, tag = 'scoped memory for tpu_custom_call.1']
    #allocation5 [shape = 'u8[512]{0}', space=vmem, size = 0x400, scoped, tag = 'output window, operand 0, single buffered']
    %8 = vsyncpa [#allocation3], 0
    %9 = vsyncpa [#allocation4], 0
    // Predicated region
    $region2: #{tpu_custom_call.1} parent=1 // pred_check
      _
    $region3: #{tpu_custom_call.1} parent=1 // pred_check_branch
      %11 = sbr.rel (0) target = $region5
    $region4: #{tpu_custom_call.1} parent=1 // pred_region
      %s12 = sadd.s32 0, 0
      %p13 = scmp.lt.s32.totalorder %s12, 0
      %s14 = scalar_select %p13, %s12, 0
      %s15 = smul.u32 3, %s14
      %p16 = scmp.lt.s32.totalorder %s15, 2
      %s17 = scalar_select %p16, %s15, 2
      %s18 = smul.addr %s17, 8
      %s19 = scalar_lea.vmem %s0, %s18
      %s20 = sadd.s32 0, 0
      %p21 = scmp.lt.s32.totalorder %s20, 0
      %s22 = scalar_select %p21, %s20, 0
      %s23 = smul.u32 3, %s22
    $region5: #{tpu_custom_call.1} parent=1 // pred_fallthru
      _
    // Predicated region
    $region6: #{tpu_custom_call.1} parent=1 // pred_check
      _
    $region7: #{tpu_custom_call.1} parent=1 // pred_check_branch
      %25 = sbr.rel (0) target = $region9
    $region8: #{tpu_custom_call.1} parent=1 // pred_region
      %s26 = sadd.s32 0, 0
      %p27 = scmp.lt.s32.totalorder %s26, 0
      %s28 = scalar_select %p27, %s26, 0
      %s29 = smul.u32 3, %s28
      %p30 = scmp.lt.s32.totalorder %s29, 2
      %s31 = scalar_select %p30, %s29, 2
      %s32 = smul.addr %s31, 8
      %s33 = scalar_lea.vmem %s1, %s32
      %s34 = sadd.s32 0, 0
      %p35 = scmp.lt.s32.totalorder %s34, 0
      %s36 = scalar_select %p35, %s34, 0
      %s37 = smul.u32 3, %s36
    $region9: #{tpu_custom_call.1} parent=1 // pred_fallthru
      _
    // Predicated region
    $region10: #{tpu_custom_call.1} parent=1 // pred_check
      _
    $region11: #{tpu_custom_call.1} parent=1 // pred_check_branch
      %39 = sbr.rel (0) target = $region13
    $region12: #{tpu_custom_call.1} parent=1 // pred_region
      %s40 = sadd.s32 0, 0
      %p41 = scmp.lt.s32.totalorder %s40, 0
      %s42 = scalar_select %p41, %s40, 0
      %s43 = smul.u32 3, %s42
      %45 = vsyncadd [#allocation3], 0
      %s46 = smul.addr %s43, 8
      %s47 = scalar_lea.hbm %s2, %s46
      %s48 = sshll.u32 %s47, 4
      %s49 = int_to_ptr.hbm [resolvable:$true] %s48
      %s50 = sshll.u32 [#allocation2], 4
      %s51 = int_to_ptr.vmem [resolvable:$true] %s50
      %56 = dma.hbm_to_vmem [thread:$0]  %s49, 384, %s51, [#allocation3], 128, 128, 8
    $region13: #{tpu_custom_call.1} parent=1 // pred_fallthru
      _
    // Predicated region
    $region14: #{tpu_custom_call.1} parent=1 // pred_check
      _
    $region15: #{tpu_custom_call.1} parent=1 // pred_check_branch
      %58 = sbr.rel (0) target = $region17
    $region16: #{tpu_custom_call.1} parent=1 // pred_region
      %60 = dma.done [#allocation3], 384
    $region17: #{tpu_custom_call.1} parent=1 // pred_fallthru
      _
    %s61 = sadd.s32 0, 0
    %p62 = scmp.lt.s32.totalorder %s61, 0
    %s63 = scalar_select %p62, %s61, 0
    %s64 = smul.u32 3, %s63
    %p65 = scmp.lt.s32.totalorder %s64, 2
    %s66 = scalar_select %p65, %s64, 2
    %s67 = smul.addr %s66, 8
    %s68 = scalar_lea.vmem %s0, %s67
    %s69 = sadd.s32 0, 0
    %p70 = scmp.lt.s32.totalorder %s69, 0
    %s71 = scalar_select %p70, %s69, 0
    %s72 = smul.u32 3, %s71
    %p73 = scmp.lt.s32.totalorder %s72, 2
    %s74 = scalar_select %p73, %s72, 2
    %s75 = smul.addr %s74, 8
    %s76 = scalar_lea.vmem %s1, %s75
    %s77 = sadd.s32 0, 0
    %p78 = scmp.lt.s32.totalorder %s77, 0
    %s79 = scalar_select %p78, %s77, 0
    %s80 = smul.u32 3, %s79
    %p81 = scmp.lt.s32.totalorder %s80, 2
    %s82 = scalar_select %p81, %s80, 2
    %s83 = smul.addr %s82, 8
    %s84 = scalar_lea.vmem %s0, %s83
    %s85 = sadd.s32 0, 0
    %p86 = scmp.lt.s32.totalorder %s85, 0
    %s87 = scalar_select %p86, %s85, 0
    %s88 = smul.u32 3, %s87
    %s89 = sadd.s32 0, 0
    %p90 = scmp.lt.s32.totalorder %s89, 0
    %s91 = scalar_select %p90, %s89, 0
    %s92 = smul.u32 3, %s91
    %p93 = scmp.lt.s32.totalorder %s92, 2
    %s94 = scalar_select %p93, %s92, 2
    %s95 = smul.addr %s94, 8
    %s96 = scalar_lea.vmem %s1, %s95
    %s97 = sadd.s32 0, 0
    %p98 = scmp.lt.s32.totalorder %s97, 0
    %s99 = scalar_select %p98, %s97, 0
    %s100 = smul.u32 3, %s99
    %s101 = sadd.s32 0, 0
    %p102 = scmp.lt.s32.totalorder %s101, 0
    %s103 = scalar_select %p102, %s101, 0
    %s104 = smul.u32 3, %s103
    %p105 = scmp.eq.s32.totalorder 0, 0
    // Predicated region
    $region18: #{tpu_custom_call.1} parent=1 // pred_check
      %p106 = pneg %p105
    $region19: #{tpu_custom_call.1} parent=1 // pred_check_branch
      %108 = sbr.rel (%p106) target = $region21
    $region20: #{tpu_custom_call.1} parent=1 // pred_region
      %vm109 = vcmask 0
      %110 = vst.msk [vmem:[#allocation5] sm:$0x1] %vm109, 0.0
    $region21: #{tpu_custom_call.1} parent=1 // pred_fallthru
      _
    %v111 = vld [vmem:[%s84] sm:$0xff]
    %v112 = vld [vmem:[%s84 + $0x8] sm:$0xff]
    %v113 = vld [vmem:[%s84 + $0x10] sm:$0xf]
    %v114 = vld [vmem:[#allocation2] sm:$0xff]
    %v115 = vld [vmem:[#allocation2 + $0x8] sm:$0xff]
    %v116 = vld [vmem:[#allocation2 + $0x10] sm:$0xf]
    %v117 = vld [vmem:[%s96] sm:$0xff]
    %v118 = vld [vmem:[%s96 + $0x8] sm:$0xff]
    %v119 = vld [vmem:[%s96 + $0x10] sm:$0xf]
    %s120 = sadd.s32 0, 0
    %v121 = vlaneseq
    %v122 = vshrl.u32 %v121, 7
    %v123 = vadd.s32 %v122, 8
    %v124 = vadd.s32 %v122, 16
    %s125 = smul.u32 %s120, 20
    %v126 = vstv %s125
    %v127 = vadd.s32 %v122, %v126
    %v128 = vadd.s32 %v123, %v126
    %v129 = vadd.s32 %v124, %v126
    %vm130 = vcmp.lt.s32.totalorder %v127, 20
    %vm131 = vcmp.lt.s32.totalorder %v128, 20
    %vm132 = vcmp.lt.s32.totalorder %v129, 20
    %vm133 = vcmask 261120
    %v134 = vsel %vm133, %v111, -inf
    %135 = vmax.xlane.f32.xlu0 %v134
    %v136 = vpop.xlane.xlu0 %135
    %v137 = vsel %vm133, %v112, -inf
    %138 = vmax.xlane.f32.xlu0 %v137
    %v139 = vpop.xlane.xlu0 %138
    %vm140 = vcmask 257024
    %v141 = vsel %vm140, %v113, -inf
    %142 = vmax.xlane.f32.xlu0 %v141
    %v143 = vpop.xlane.xlu0 %142
    %v144 = vsub.f32 %v111, %v136
    %v145 = vsub.f32 %v112, %v139
    %v146 = vsub.f32 %v113, %v143
    %v147 = vmul.f32 %v144, 1.442695
    %v148 = vpow.pop %v147
    %v149 = vmul.f32 %v145, 1.442695
    %v150 = vpow.pop %v149
    %v151 = vmul.f32 %v146, 1.442695
    %v152 = vpow.pop %v151
    %v153 = vsel %vm133, %v148, 0.0
    %154 = vadd.xlane.f32.xlu0 %v153
    %v155 = vpop.xlane.xlu0 %154
    %v156 = vsel %vm133, %v150, 0.0
    %157 = vadd.xlane.f32.xlu0 %v156
    %v158 = vpop.xlane.xlu0 %157
    %v159 = vsel %vm140, %v152, 0.0
    %160 = vadd.xlane.f32.xlu0 %v159
    %v161 = vpop.xlane.xlu0 %160
    %v162 = vlog2.pop %v155
    %v163 = vmul.f32 %v162, 0.6931472
    %v164 = vlog2.pop %v158
    %v165 = vmul.f32 %v164, 0.6931472
    %v166 = vlog2.pop %v161
    %v167 = vmul.f32 %v166, 0.6931472
    %v168 = vlaneseq
    %v169 = vand.u32 %v168, 127
    %v170 = vmul.f32 %v114, 0.3
    %v171 = vmul.f32 %v115, 0.3
    %v172 = vmul.f32 %v116, 0.3
    %173 = vset.pattern.permute.xlu0 0
    %174 = vperm.xlu0 %173, %v117
    %v175 = vpop.permute.xlu0 %174
    %176 = vset.pattern.permute.xlu0 0
    %177 = vperm.xlu0 %176, %v118
    %v178 = vpop.permute.xlu0 %177
    %179 = vset.pattern.permute.xlu0 0
    %180 = vperm.xlu0 %179, %v119
    %v181 = vpop.permute.xlu0 %180
    %vm182 = vcmp.eq.s32.totalorder %v169, %v175
    %vm183 = vcmp.eq.s32.totalorder %v169, %v178
    %vm184 = vcmp.eq.s32.totalorder %v169, %v181
    %v185 = vsel %vm182, 0.7, 0.0
    %v186 = vsel %vm183, 0.7, 0.0
    %v187 = vsel %vm184, 0.7, 0.0
    %v188 = vadd.f32 %v170, %v185
    %v189 = vadd.f32 %v171, %v186
    %v190 = vadd.f32 %v172, %v187
    %v191 = vsub.f32 %v144, %v163
    %v192 = vsub.f32 %v145, %v165
    %v193 = vsub.f32 %v146, %v167
    %v194 = vmul.f32 %v188, %v191
    %v195 = vmul.f32 %v189, %v192
    %v196 = vmul.f32 %v190, %v193
    %v197 = vsel %vm133, %v194, 0.0
    %198 = vadd.xlane.f32.xlu0 %v197
    %v199 = vpop.xlane.xlu0 %198
    %v200 = vsel %vm133, %v195, 0.0
    %201 = vadd.xlane.f32.xlu0 %v200
    %v202 = vpop.xlane.xlu0 %201
    %v203 = vsel %vm140, %v196, 0.0
    %204 = vadd.xlane.f32.xlu0 %v203
    %v205 = vpop.xlane.xlu0 %204
    %v206 = vsub.f32 0.0, %v199
    %v207 = vsub.f32 0.0, %v202
    %v208 = vsub.f32 0.0, %v205
    %v209 = vsel %vm130, %v206, 0.0
    %v210 = vsel %vm131, %v207, 0.0
    %v211 = vsel %vm132, %v208, 0.0
    %v212 = vld [vmem:[#allocation5] sm:$0x1]
    %v213 = vadd.f32 %v209, %v210
    %vm214 = vcmask 1043456
    %v215 = vsel %vm214, %v211, 0.0
    %v216 = vadd.f32 %v213, %v215
    %v217 = vrot.slane %v216, 4
    %v218 = vadd.f32 %v216, %v217
    %v219 = vrot.slane %v218, 2
    %v220 = vadd.f32 %v218, %v219
    %v221 = vrot.slane %v220, 1
    %v222 = vadd.f32 %v220, %v221
    %v223 = vadd.f32 %v212, %v222
    %vm224 = vcmask 0
    %225 = vst.msk [vmem:[#allocation5] sm:$0x1] %vm224, %v223
    // Predicated region
    $region22: #{tpu_custom_call.1} parent=1 // pred_check
      _
    $region23: #{tpu_custom_call.1} parent=1 // pred_check_branch
      %227 = sbr.rel (0) target = $region25
    $region24: #{tpu_custom_call.1} parent=1 // pred_region
      %229 = vsyncadd [#allocation4], 0
      %s231 = sshll.u32 [#allocation5], 4
      %s232 = int_to_ptr.vmem [resolvable:$true] %s231
      %s233 = sshll.u32 %s3, 4
      %s234 = int_to_ptr.hbm [resolvable:$true] %s233
      %236 = dma.vmem_to_hbm [thread:$0]  %s232, 16, %s234, [#allocation4]
    $region25: #{tpu_custom_call.1} parent=1 // pred_fallthru
      _
    // Predicated region
    $region26: #{tpu_custom_call.1} parent=1 // pred_check
      _
    $region27: #{tpu_custom_call.1} parent=1 // pred_check_branch
      %238 = sbr.rel (0) target = $region29
    $region28: #{tpu_custom_call.1} parent=1 // pred_region
      %240 = dma.done [#allocation4], 16
    $region29: #{tpu_custom_call.1} parent=1 // pred_fallthru
      _
    %241 = vsyncpa [#allocation3], 1
    %242 = vsyncpa [#allocation4], 1

</llo_original>
